<compile_context>
chip_gen: v6e
topology: v6e:2x2x1
jax: 0.10.0
libtpu: 0.0.40
codegen_flags: <defaults>
</compile_context>

<pallas_src>
import functools

import jax
import jax.numpy as jnp
from jax import lax
from jax.experimental import pallas as pl
from jax.experimental.pallas import tpu as pltpu


def _sepconv_kernel(x_ref, dww_ref, pww_ref, b_ref, o_ref, *,
                    kh_sz, kw_sz, oh, cin, ow_cin):
    """One batch chunk per grid step (lane-dense fused layout).

    x_ref   : (BB, H, W*Cin)       input, W and Cin fused on the lane axis
    dww_ref : (KH*KW, OW*Cin)      depthwise weights, pre-tiled over OW
    pww_ref : (OW*Cin, OW*Cout)    block-diagonal pointwise (1x1) weights
    b_ref   : (1, OW*Cout)         fused bias (b_dw @ W_pw + b_pw), tiled over OW
    o_ref   : (BB, OH, OW*Cout)    output, OW and Cout fused on the lane axis
    """
    bb = x_ref.shape[0]

    # ---- depthwise conv (valid, stride 1): unrolled over the small KHxKW
    # window; every term is a lane-dense elementwise VPU MAC in the fused
    # (.., OW*Cin) layout.
    w_dw = dww_ref[...].astype(jnp.float32)                 # (KH*KW, OW*Cin)
    acc = jnp.zeros((bb, oh, ow_cin), jnp.float32)
    for r in range(kh_sz):
        for s in range(kw_sz):
            win = x_ref[:, r:r + oh, s * cin:s * cin + ow_cin].astype(jnp.float32)
            acc = acc + win * w_dw[r * kw_sz + s]

    # ---- pointwise 1x1 conv: one MXU matmul per image against the
    # block-diagonal (OW*Cin, OW*Cout) weight gives the output directly in the
    # fused lane-dense layout -> unmasked stores, no cross-lane broadcasts.
    w_pw = pww_ref[...].astype(jnp.float32)                 # (OW*Cin, OW*Cout)
    bias = b_ref[0].astype(jnp.float32)                     # (OW*Cout,)
    for b in range(bb):                                     # bb is small & static
        out_b = jnp.dot(acc[b], w_pw, preferred_element_type=jnp.float32)
        o_ref[b] = (out_b + bias).astype(o_ref.dtype)


def _pick_batch_block(n, per_image_bytes, budget_bytes):
    """Largest divisor of n whose double-buffered in+out block fits the budget."""
    cap = max(1, budget_bytes // max(per_image_bytes, 1))
    bb = 1
    for d in range(1, n + 1):
        if n % d == 0 and d <= cap:
            bb = d
    return bb


def separable_conv2d(x_nchw, dw_weight, dw_bias, pw_weight, pw_bias,
                     *, vmem_budget_bytes=4 << 20):
    """PyTorch-equivalent forward of SeparableConv2d.

    x_nchw    : (N, Cin, H, W)
    dw_weight : (Cin, 1, KH, KW)     (groups=Cin, depthwise multiplier=1)
    dw_bias   : (Cin,)
    pw_weight : (Cout, Cin, 1, 1)
    pw_bias   : (Cout,)
    returns   : (N, Cout, OH, OW)    with OH = H-KH+1, OW = W-KW+1 (valid conv)
    """
    n, cin, h, w = x_nchw.shape
    kh, kw = int(dw_weight.shape[2]), int(dw_weight.shape[3])
    cout = int(pw_weight.shape[0])
    oh, ow = h - kh + 1, w - kw + 1

    # ---- wrapper-side repacking (plain-JAX glue; the NCHW->NHWC transpose is
    # fused with the lane-dense reshape so there is a single relayout in/out).
    x = jnp.transpose(x_nchw, (0, 2, 3, 1)).reshape(n, h, w * cin)

    # depthwise weights -> (KH*KW, OW*Cin), each (kh,kw) row tiled OW times
    w_dw = jnp.transpose(dw_weight[:, 0, :, :], (1, 2, 0)).reshape(kh * kw, cin)
    w_dw_tiled = jnp.tile(w_dw, (1, ow))

    # pointwise 1x1 weights -> block-diagonal (OW*Cin, OW*Cout) matrix:
    #   W_big[p*Cin + c, q*Cout + d] = (p == q) * W_pw[c, d]
    w_pw = jnp.transpose(pw_weight[:, :, 0, 0], (1, 0))               # (Cin, Cout)
    eye = jnp.eye(ow, dtype=w_pw.dtype)
    w_big = (eye[:, None, :, None] * w_pw[None, :, None, :]).reshape(
        ow * cin, ow * cout)
    # NOTE: for large OW*Cin this block-diagonal trick should switch to a dense
    # (OH*OW, Cin) @ (Cin, Cout) MXU matmul (with an in-kernel relayout).

    # depthwise bias folds through the 1x1 conv: b_eff = b_dw @ W_pw + b_pw
    b_eff = (dw_bias.astype(jnp.float32) @ w_pw.astype(jnp.float32)
             + pw_bias.astype(jnp.float32))
    b_tiled = jnp.tile(b_eff, (ow,)).reshape(1, ow * cout)

    # ---- batch chunking: as big as a VMEM budget allows (amortizes per-step
    # overhead); larger batches still produce a long "parallel" grid axis for
    # pipelining and v7x's two TensorCores.
    itemsize = jnp.dtype(x_nchw.dtype).itemsize
    per_img = 2 * (h * w * cin + oh * ow * cout) * itemsize   # dbl-buffered in+out
    bb = _pick_batch_block(n, per_img, vmem_budget_bytes)
    grid = (n // bb,)

    kernel = functools.partial(_sepconv_kernel, kh_sz=kh, kw_sz=kw, oh=oh,
                               cin=cin, ow_cin=ow * cin)

    out_fused = pl.pallas_call(
        kernel,
        out_shape=jax.ShapeDtypeStruct((n, oh, ow * cout), x_nchw.dtype),
        grid_spec=pltpu.PrefetchScalarGridSpec(
            num_scalar_prefetch=0,
            grid=grid,
            in_specs=[
                pl.BlockSpec((bb, h, w * cin), lambda i: (i, 0, 0)),
                pl.BlockSpec((kh * kw, ow * cin), lambda i: (0, 0)),
                pl.BlockSpec((ow * cin, ow * cout), lambda i: (0, 0)),
                pl.BlockSpec((1, ow * cout), lambda i: (0, 0)),
            ],
            out_specs=pl.BlockSpec((bb, oh, ow * cout), lambda i: (i, 0, 0)),
        ),
        compiler_params=pltpu.CompilerParams(
            dimension_semantics=("parallel",)),
    )(x, w_dw_tiled, w_big, b_tiled)

    # un-fuse the lanes and return PyTorch-style NCHW
    return jnp.transpose(out_fused.reshape(n, oh, ow, cout), (0, 3, 1, 2))


def _reference(x, dw_w, dw_b, pw_w, pw_b):
    """Pure-JAX reference matching PyTorch conv semantics (NCHW/OIHW)."""
    y = lax.conv_general_dilated(
        x, dw_w, window_strides=(1, 1), padding="VALID",
        dimension_numbers=("NCHW", "OIHW", "NCHW"),
        feature_group_count=x.shape[1],
        precision=lax.Precision.HIGHEST)
    y = y + dw_b[None, :, None, None]
    z = lax.conv_general_dilated(
        y, pw_w, window_strides=(1, 1), padding="VALID",
        dimension_numbers=("NCHW", "OIHW", "NCHW"),
        precision=lax.Precision.HIGHEST)
    z = z + pw_b[None, :, None, None]
    return z


if __name__ == "__main__":
    # SeparableConv2d(in_channels=4, out_channels=8, kernel_size=3)
    N, CIN, COUT, H, W, K = 2, 4, 8, 16, 16, 3

    key = jax.random.PRNGKey(0)
    k_x, k_dw, k_db, k_pw, k_pb = jax.random.split(key, 5)

    x = jax.random.normal(k_x, (N, CIN, H, W), dtype=jnp.float32)
    dw_weight = 0.1 * jax.random.normal(k_dw, (CIN, 1, K, K), dtype=jnp.float32)
    dw_bias = 0.1 * jax.random.normal(k_db, (CIN,), dtype=jnp.float32)
    pw_weight = 0.1 * jax.random.normal(k_pw, (COUT, CIN, 1, 1), dtype=jnp.float32)
    pw_bias = 0.1 * jax.random.normal(k_pb, (COUT,), dtype=jnp.float32)

    out = separable_conv2d(x, dw_weight, dw_bias, pw_weight, pw_bias)
    out = jax.block_until_ready(out)

    ref = _reference(x, dw_weight, dw_bias, pw_weight, pw_bias)
    assert out.shape == (N, COUT, H - K + 1, W - K + 1), out.shape
    # The pointwise 1x1 now runs on the MXU; at default precision f32 operands
    # may be evaluated via bf16 passes, so size the tolerance accordingly.
    max_err = float(jnp.max(jnp.abs(out - ref)))
    assert jnp.allclose(out, ref, atol=2e-3, rtol=2e-3), max_err

    print("KERNEL_OK")
</pallas_src>

<mosaic_0001>
module attributes {stable_mosaic.version = 11 : i64} {
  func.func @_sepconv_kernel(%arg0: i32, %arg1: memref<2x16x64xf32, #tpu.memory_space<vmem>>, %arg2: memref<9x56xf32, #tpu.memory_space<vmem>>, %arg3: memref<56x112xf32, #tpu.memory_space<vmem>>, %arg4: memref<1x112xf32, #tpu.memory_space<vmem>>, %arg5: memref<2x14x112xf32, #tpu.memory_space<vmem>>) attributes {dimension_semantics = [#tpu.dimension_semantics<parallel>], iteration_bounds = array<i64: 1>, scalar_prefetch = 0 : i64, scratch_operands = 0 : i64, tpu.core_type = #tpu.core_type<tc>, window_params = [{transform_indices = @transform_0, window_bounds = array<i64: 2, 16, 64>}, {pipeline_mode = #tpu.pipeline_mode<synchronous>, transform_indices = @transform_1, window_bounds = array<i64: 9, 56>}, {pipeline_mode = #tpu.pipeline_mode<synchronous>, transform_indices = @transform_2, window_bounds = array<i64: 56, 112>}, {pipeline_mode = #tpu.pipeline_mode<synchronous>, transform_indices = @transform_3, window_bounds = array<i64: 1, 112>}, {transform_indices = @transform_4, window_bounds = array<i64: 2, 14, 112>}]} {
    %c0 = arith.constant 0 : index
    %c0_0 = arith.constant 0 : index
    %0 = vector.load %arg2[%c0, %c0_0] : memref<9x56xf32, #tpu.memory_space<vmem>>, vector<9x56xf32>
    %cst = arith.constant 0.000000e+00 : f32
    %1 = vector.broadcast %cst : f32 to vector<2x14x56xf32>
    %c0_1 = arith.constant 0 : index
    %c0_2 = arith.constant 0 : index
    %c0_3 = arith.constant 0 : index
    %2 = vector.load %arg1[%c0_1, %c0_2, %c0_3] : memref<2x16x64xf32, #tpu.memory_space<vmem>>, vector<2x14x56xf32>
    %3 = vector.extract_strided_slice %0 {offsets = [0, 0], sizes = [1, 56], strides = [1, 1]} : vector<9x56xf32> to vector<1x56xf32>
    %4 = vector.shape_cast %3 : vector<1x56xf32> to vector<56xf32>
    %5 = vector.shape_cast %4 : vector<56xf32> to vector<1x1x56xf32>
    %6 = vector.broadcast %5 : vector<1x1x56xf32> to vector<2x14x56xf32>
    %7 = arith.mulf %2, %6 : vector<2x14x56xf32>
    %8 = arith.addf %1, %7 : vector<2x14x56xf32>
    %c0_4 = arith.constant 0 : index
    %c0_5 = arith.constant 0 : index
    %c4 = arith.constant 4 : index
    %9 = vector.load %arg1[%c0_4, %c0_5, %c4] : memref<2x16x64xf32, #tpu.memory_space<vmem>>, vector<2x14x56xf32>
    %10 = vector.extract_strided_slice %0 {offsets = [1, 0], sizes = [1, 56], strides = [1, 1]} : vector<9x56xf32> to vector<1x56xf32>
    %11 = vector.shape_cast %10 : vector<1x56xf32> to vector<56xf32>
    %12 = vector.shape_cast %11 : vector<56xf32> to vector<1x1x56xf32>
    %13 = vector.broadcast %12 : vector<1x1x56xf32> to vector<2x14x56xf32>
    %14 = arith.mulf %9, %13 : vector<2x14x56xf32>
    %15 = arith.addf %8, %14 : vector<2x14x56xf32>
    %c0_6 = arith.constant 0 : index
    %c0_7 = arith.constant 0 : index
    %c8 = arith.constant 8 : index
    %16 = vector.load %arg1[%c0_6, %c0_7, %c8] : memref<2x16x64xf32, #tpu.memory_space<vmem>>, vector<2x14x56xf32>
    %17 = vector.extract_strided_slice %0 {offsets = [2, 0], sizes = [1, 56], strides = [1, 1]} : vector<9x56xf32> to vector<1x56xf32>
    %18 = vector.shape_cast %17 : vector<1x56xf32> to vector<56xf32>
    %19 = vector.shape_cast %18 : vector<56xf32> to vector<1x1x56xf32>
    %20 = vector.broadcast %19 : vector<1x1x56xf32> to vector<2x14x56xf32>
    %21 = arith.mulf %16, %20 : vector<2x14x56xf32>
    %22 = arith.addf %15, %21 : vector<2x14x56xf32>
    %c0_8 = arith.constant 0 : index
    %c1 = arith.constant 1 : index
    %c0_9 = arith.constant 0 : index
    %23 = vector.load %arg1[%c0_8, %c1, %c0_9] : memref<2x16x64xf32, #tpu.memory_space<vmem>>, vector<2x14x56xf32>
    %24 = vector.extract_strided_slice %0 {offsets = [3, 0], sizes = [1, 56], strides = [1, 1]} : vector<9x56xf32> to vector<1x56xf32>
    %25 = vector.shape_cast %24 : vector<1x56xf32> to vector<56xf32>
    %26 = vector.shape_cast %25 : vector<56xf32> to vector<1x1x56xf32>
    %27 = vector.broadcast %26 : vector<1x1x56xf32> to vector<2x14x56xf32>
    %28 = arith.mulf %23, %27 : vector<2x14x56xf32>
    %29 = arith.addf %22, %28 : vector<2x14x56xf32>
    %c0_10 = arith.constant 0 : index
    %c1_11 = arith.constant 1 : index
    %c4_12 = arith.constant 4 : index
    %30 = vector.load %arg1[%c0_10, %c1_11, %c4_12] : memref<2x16x64xf32, #tpu.memory_space<vmem>>, vector<2x14x56xf32>
    %31 = vector.extract_strided_slice %0 {offsets = [4, 0], sizes = [1, 56], strides = [1, 1]} : vector<9x56xf32> to vector<1x56xf32>
    %32 = vector.shape_cast %31 : vector<1x56xf32> to vector<56xf32>
    %33 = vector.shape_cast %32 : vector<56xf32> to vector<1x1x56xf32>
    %34 = vector.broadcast %33 : vector<1x1x56xf32> to vector<2x14x56xf32>
    %35 = arith.mulf %30, %34 : vector<2x14x56xf32>
    %36 = arith.addf %29, %35 : vector<2x14x56xf32>
    %c0_13 = arith.constant 0 : index
    %c1_14 = arith.constant 1 : index
    %c8_15 = arith.constant 8 : index
    %37 = vector.load %arg1[%c0_13, %c1_14, %c8_15] : memref<2x16x64xf32, #tpu.memory_space<vmem>>, vector<2x14x56xf32>
    %38 = vector.extract_strided_slice %0 {offsets = [5, 0], sizes = [1, 56], strides = [1, 1]} : vector<9x56xf32> to vector<1x56xf32>
    %39 = vector.shape_cast %38 : vector<1x56xf32> to vector<56xf32>
    %40 = vector.shape_cast %39 : vector<56xf32> to vector<1x1x56xf32>
    %41 = vector.broadcast %40 : vector<1x1x56xf32> to vector<2x14x56xf32>
    %42 = arith.mulf %37, %41 : vector<2x14x56xf32>
    %43 = arith.addf %36, %42 : vector<2x14x56xf32>
    %c0_16 = arith.constant 0 : index
    %c2 = arith.constant 2 : index
    %c0_17 = arith.constant 0 : index
    %44 = vector.load %arg1[%c0_16, %c2, %c0_17] : memref<2x16x64xf32, #tpu.memory_space<vmem>>, vector<2x14x56xf32>
    %45 = vector.extract_strided_slice %0 {offsets = [6, 0], sizes = [1, 56], strides = [1, 1]} : vector<9x56xf32> to vector<1x56xf32>
    %46 = vector.shape_cast %45 : vector<1x56xf32> to vector<56xf32>
    %47 = vector.shape_cast %46 : vector<56xf32> to vector<1x1x56xf32>
    %48 = vector.broadcast %47 : vector<1x1x56xf32> to vector<2x14x56xf32>
    %49 = arith.mulf %44, %48 : vector<2x14x56xf32>
    %50 = arith.addf %43, %49 : vector<2x14x56xf32>
    %c0_18 = arith.constant 0 : index
    %c2_19 = arith.constant 2 : index
    %c4_20 = arith.constant 4 : index
    %51 = vector.load %arg1[%c0_18, %c2_19, %c4_20] : memref<2x16x64xf32, #tpu.memory_space<vmem>>, vector<2x14x56xf32>
    %52 = vector.extract_strided_slice %0 {offsets = [7, 0], sizes = [1, 56], strides = [1, 1]} : vector<9x56xf32> to vector<1x56xf32>
    %53 = vector.shape_cast %52 : vector<1x56xf32> to vector<56xf32>
    %54 = vector.shape_cast %53 : vector<56xf32> to vector<1x1x56xf32>
    %55 = vector.broadcast %54 : vector<1x1x56xf32> to vector<2x14x56xf32>
    %56 = arith.mulf %51, %55 : vector<2x14x56xf32>
    %57 = arith.addf %50, %56 : vector<2x14x56xf32>
    %c0_21 = arith.constant 0 : index
    %c2_22 = arith.constant 2 : index
    %c8_23 = arith.constant 8 : index
    %58 = vector.load %arg1[%c0_21, %c2_22, %c8_23] : memref<2x16x64xf32, #tpu.memory_space<vmem>>, vector<2x14x56xf32>
    %59 = vector.extract_strided_slice %0 {offsets = [8, 0], sizes = [1, 56], strides = [1, 1]} : vector<9x56xf32> to vector<1x56xf32>
    %60 = vector.shape_cast %59 : vector<1x56xf32> to vector<56xf32>
    %61 = vector.shape_cast %60 : vector<56xf32> to vector<1x1x56xf32>
    %62 = vector.broadcast %61 : vector<1x1x56xf32> to vector<2x14x56xf32>
    %63 = arith.mulf %58, %62 : vector<2x14x56xf32>
    %64 = arith.addf %57, %63 : vector<2x14x56xf32>
    %c0_24 = arith.constant 0 : index
    %c0_25 = arith.constant 0 : index
    %65 = vector.load %arg3[%c0_24, %c0_25] : memref<56x112xf32, #tpu.memory_space<vmem>>, vector<56x112xf32>
    %c0_26 = arith.constant 0 : index
    %c0_27 = arith.constant 0 : index
    %66 = vector.load %arg4[%c0_26, %c0_27] : memref<1x112xf32, #tpu.memory_space<vmem>>, vector<1x112xf32>
    %67 = vector.shape_cast %66 : vector<1x112xf32> to vector<112xf32>
    %68 = vector.extract_strided_slice %64 {offsets = [0, 0, 0], sizes = [1, 14, 56], strides = [1, 1, 1]} : vector<2x14x56xf32> to vector<1x14x56xf32>
    %69 = vector.shape_cast %68 : vector<1x14x56xf32> to vector<14x56xf32>
    %cst_28 = arith.constant dense<0.000000e+00> : vector<14x112xf32>
    %70 = tpu.matmul %69, %65, %cst_28 {dimension_numbers = #tpu.dot_dimension_numbers<[1], [0], [0], [1], [0, 0, 1, 1], [], []>} : vector<14x56xf32>, vector<56x112xf32>, vector<14x112xf32> -> vector<14x112xf32>
    %71 = vector.shape_cast %67 : vector<112xf32> to vector<1x112xf32>
    %72 = vector.broadcast %71 : vector<1x112xf32> to vector<14x112xf32>
    %73 = arith.addf %70, %72 : vector<14x112xf32>
    %c0_29 = arith.constant 0 : index
    %c0_30 = arith.constant 0 : index
    %c0_31 = arith.constant 0 : index
    %74 = vector.load %arg5[%c0_29, %c0_30, %c0_31] : memref<2x14x112xf32, #tpu.memory_space<vmem>>, vector<1x14x112xf32>
    %75 = vector.shape_cast %74 : vector<1x14x112xf32> to vector<14x112xf32>
    %76 = vector.shape_cast %73 : vector<14x112xf32> to vector<1x14x112xf32>
    tpu.vector_store %arg5[%c0_29, %c0_30, %c0_31], %76 {strides = array<i32>} : memref<2x14x112xf32, #tpu.memory_space<vmem>>, vector<1x14x112xf32>,
    %77 = vector.extract_strided_slice %64 {offsets = [1, 0, 0], sizes = [1, 14, 56], strides = [1, 1, 1]} : vector<2x14x56xf32> to vector<1x14x56xf32>
    %78 = vector.shape_cast %77 : vector<1x14x56xf32> to vector<14x56xf32>
    %cst_32 = arith.constant dense<0.000000e+00> : vector<14x112xf32>
    %79 = tpu.matmul %78, %65, %cst_32 {dimension_numbers = #tpu.dot_dimension_numbers<[1], [0], [0], [1], [0, 0, 1, 1], [], []>} : vector<14x56xf32>, vector<56x112xf32>, vector<14x112xf32> -> vector<14x112xf32>
    %80 = vector.shape_cast %67 : vector<112xf32> to vector<1x112xf32>
    %81 = vector.broadcast %80 : vector<1x112xf32> to vector<14x112xf32>
    %82 = arith.addf %79, %81 : vector<14x112xf32>
    %c1_33 = arith.constant 1 : index
    %c0_34 = arith.constant 0 : index
    %c0_35 = arith.constant 0 : index
    %83 = vector.load %arg5[%c1_33, %c0_34, %c0_35] : memref<2x14x112xf32, #tpu.memory_space<vmem>>, vector<1x14x112xf32>
    %84 = vector.shape_cast %83 : vector<1x14x112xf32> to vector<14x112xf32>
    %85 = vector.shape_cast %82 : vector<14x112xf32> to vector<1x14x112xf32>
    tpu.vector_store %arg5[%c1_33, %c0_34, %c0_35], %85 {strides = array<i32>} : memref<2x14x112xf32, #tpu.memory_space<vmem>>, vector<1x14x112xf32>,
    return
  }
  func.func @transform_0(%arg0: i32) -> (i32, i32, i32) {
    %c0_i32 = arith.constant 0 : i32
    %c0_i32_0 = arith.constant 0 : i32
    %c0_i32_1 = arith.constant 0 : i32
    return %arg0, %c0_i32, %c0_i32_0 : i32, i32, i32
  }
  func.func @transform_1(%arg0: i32) -> (i32, i32) {
    %c0_i32 = arith.constant 0 : i32
    %c0_i32_0 = arith.constant 0 : i32
    %c0_i32_1 = arith.constant 0 : i32
    return %c0_i32, %c0_i32_0 : i32, i32
  }
  func.func @transform_2(%arg0: i32) -> (i32, i32) {
    %c0_i32 = arith.constant 0 : i32
    %c0_i32_0 = arith.constant 0 : i32
    %c0_i32_1 = arith.constant 0 : i32
    return %c0_i32, %c0_i32_0 : i32, i32
  }
  func.func @transform_3(%arg0: i32) -> (i32, i32) {
    %c0_i32 = arith.constant 0 : i32
    %c0_i32_0 = arith.constant 0 : i32
    %c0_i32_1 = arith.constant 0 : i32
    return %c0_i32, %c0_i32_0 : i32, i32
  }
  func.func @transform_4(%arg0: i32) -> (i32, i32, i32) {
    %c0_i32 = arith.constant 0 : i32
    %c0_i32_0 = arith.constant 0 : i32
    %c0_i32_1 = arith.constant 0 : i32
    return %arg0, %c0_i32, %c0_i32_0 : i32, i32, i32
  }
}

</mosaic_0001>

<llo_original>
// kernel: tpu_custom_call.1
$region0: #{tpu_custom_call.1}
  #allocation0 [shape = 'u32[]', space=smem, size = 0x4, offset = 0x4, fixed_abs, tag = 'smem constant byte address 0x4 - core index']
  #allocation1 [shape = 'u32[144,128]{1,0:T(1,128)}', space=vmem, size = 0x12000, scoped, tag = 'internal scratch']
  %s0 = inlined_call_operand.hbm [shape: f32[2,16,64], index: 0, kind: input, shape index: {}]
  %s1 = inlined_call_operand.hbm [shape: f32[9,56], index: 1, kind: input, shape index: {}]
  %s2 = inlined_call_operand.hbm [shape: f32[56,112], index: 2, kind: input, shape index: {}]
  %s3 = inlined_call_operand.vmem [shape: f32[1,112], index: 3, kind: input, shape index: {}]
  %s4 = inlined_call_operand.vmem [shape: f32[2,14,112], index: 4, kind: output, shape index: {}]
  %s5 = sld [smem:[#allocation0]]
  $region38: #{tpu_custom_call.1} parent=0
    _
  %s7 = ssub.s32 1, %s5
  %s8 = scalar_select 0, %s7, %s5
  $region1: #{tpu_custom_call.1} parent=0
    #allocation2 [shape = 'u8[16384]{0}', space=vmem, size = 0x4000, scoped, tag = 'input window, operand 0, single buffered']
    #allocation3 [shape = 's32[1]{0}', space=sflag, size = 0x4, scoped, tag = 'scoped memory for tpu_custom_call.1']
    #allocation4 [shape = 'u8[8192]{0}', space=vmem, size = 0x2000, scoped, tag = 'input window, operand 1, single buffered']
    #allocation5 [shape = 's32[1]{0}', space=sflag, size = 0x4, scoped, tag = 'scoped memory for tpu_custom_call.1']
    #allocation6 [shape = 'u8[28672]{0}', space=vmem, size = 0x7000, scoped, tag = 'input window, operand 2, single buffered']
    %9 = vsyncpa [#allocation3], 0
    %10 = vsyncpa [#allocation5], 0
    // Predicated region
    $region2: #{tpu_custom_call.1} parent=1 // pred_check
      _
    $region3: #{tpu_custom_call.1} parent=1 // pred_check_branch
      %12 = sbr.rel (0) target = $region5
    $region4: #{tpu_custom_call.1} parent=1 // pred_region
      %s14 = ssub.s32 512, 512
      %15 = vsyncadd [#allocation3], %s14
      %s16 = sshll.u32 [#allocation2], 4
      %s17 = int_to_ptr.vmem [resolvable:$true] %s16
      %22 = dma.hbm_to_vmem [thread:$0]  %s0, 512, %s17, [#allocation3], 128, 128, 8
    $region5: #{tpu_custom_call.1} parent=1 // pred_fallthru
      _
    // Predicated region
    $region6: #{tpu_custom_call.1} parent=1 // pred_check
      _
    $region7: #{tpu_custom_call.1} parent=1 // pred_check_branch
      %24 = sbr.rel (0) target = $region9
    $region8: #{tpu_custom_call.1} parent=1 // pred_region
      %s26 = ssub.s32 256, 256
      %27 = vsyncadd [#allocation5], %s26
      %s28 = sshll.u32 [#allocation4], 4
      %s29 = int_to_ptr.vmem [resolvable:$true] %s28
      %34 = dma.hbm_to_vmem [thread:$0]  %s1, 256, %s29, [#allocation5], 128, 128, 8
    $region9: #{tpu_custom_call.1} parent=1 // pred_fallthru
      _
    // Predicated region
    $region10: #{tpu_custom_call.1} parent=1 // pred_check
      _
    $region11: #{tpu_custom_call.1} parent=1 // pred_check_branch
      %36 = sbr.rel (0) target = $region13
    $region12: #{tpu_custom_call.1} parent=1 // pred_region
      %s38 = ssub.s32 896, 896
      %39 = vsyncadd [#allocation5], %s38
      %s40 = sshll.u32 [#allocation6], 4
      %s41 = int_to_ptr.vmem [resolvable:$true] %s40
      %46 = dma.hbm_to_vmem [thread:$0]  %s2, 896, %s41, [#allocation5], 128, 128, 8
    $region13: #{tpu_custom_call.1} parent=1 // pred_fallthru
      _
    // Predicated region
    $region14: #{tpu_custom_call.1} parent=1 // pred_check
      _
    $region15: #{tpu_custom_call.1} parent=1 // pred_check_branch
      %48 = sbr.rel (0) target = $region17
    $region16: #{tpu_custom_call.1} parent=1 // pred_region
      _
    $region17: #{tpu_custom_call.1} parent=1 // pred_fallthru
      _
    // Predicated region
    $region18: #{tpu_custom_call.1} parent=1 // pred_check
      _
    $region19: #{tpu_custom_call.1} parent=1 // pred_check_branch
      %50 = sbr.rel (0) target = $region21
    $region20: #{tpu_custom_call.1} parent=1 // pred_region
      %51 = dma.done [#allocation3], 512
    $region21: #{tpu_custom_call.1} parent=1 // pred_fallthru
      _
    // Predicated region
    $region22: #{tpu_custom_call.1} parent=1 // pred_check
      _
    $region23: #{tpu_custom_call.1} parent=1 // pred_check_branch
      %53 = sbr.rel (0) target = $region25
    $region24: #{tpu_custom_call.1} parent=1 // pred_region
      %54 = dma.done [#allocation5], 256
    $region25: #{tpu_custom_call.1} parent=1 // pred_fallthru
      _
    // Predicated region
    $region26: #{tpu_custom_call.1} parent=1 // pred_check
      _
    $region27: #{tpu_custom_call.1} parent=1 // pred_check_branch
      %56 = sbr.rel (0) target = $region29
    $region28: #{tpu_custom_call.1} parent=1 // pred_region
      %57 = dma.done [#allocation5], 896
    $region29: #{tpu_custom_call.1} parent=1 // pred_fallthru
      _
    %v58 = vld [vmem:[#allocation4] sm:$0xff]
    %v59 = vld [vmem:[#allocation4 + $0x8] sm:$0x1]
    %v60 = vld [vmem:[#allocation2] sm:$0xff]
    %v61 = vld [vmem:[#allocation2 + $0x8] sm:$0x3f]
    %v62 = vld [vmem:[#allocation2 + $0x10] sm:$0xff]
    %v63 = vld [vmem:[#allocation2 + $0x18] sm:$0x3f]
    %v64 = vlaneseq
    %v65 = vshrl.u32 %v64, 7
    %v66 = vsub.s32 0, %v65
    %v67 = vrot.slane %v58, %v66
    %v68 = vmul.f32 %v60, %v67
    %v69 = vmul.f32 %v61, %v67
    %v70 = vmul.f32 %v62, %v67
    %v71 = vmul.f32 %v63, %v67
    %v72 = vadd.f32 %v68, 0.0
    %v73 = vadd.f32 %v69, 0.0
    %v74 = vadd.f32 %v70, 0.0
    %v75 = vadd.f32 %v71, 0.0
    %v76 = vlaneseq
    %v77 = vshrl.u32 %v76, 7
    %v78 = vsub.s32 1, %v77
    %v79 = vrot.slane %v58, %v78
    %81 = vrot.lane.b32.xlu0 %v79, 4
    %v82 = vpop.permute.xlu0 %81
    %v84 = vmul.f32 %v60, %v82
    %v85 = vmul.f32 %v61, %v82
    %v86 = vmul.f32 %v62, %v82
    %v87 = vmul.f32 %v63, %v82
    %92 = vrot.lane.b32.xlu0 %v84, 124
    %v93 = vpop.permute.xlu0 %92
    %94 = vrot.lane.b32.xlu0 %v85, 124
    %v95 = vpop.permute.xlu0 %94
    %96 = vrot.lane.b32.xlu0 %v86, 124
    %v97 = vpop.permute.xlu0 %96
    %98 = vrot.lane.b32.xlu0 %v87, 124
    %v99 = vpop.permute.xlu0 %98
    %v104 = vadd.f32 %v72, %v93
    %v105 = vadd.f32 %v73, %v95
    %v106 = vadd.f32 %v74, %v97
    %v107 = vadd.f32 %v75, %v99
    %v108 = vlaneseq
    %v109 = vshrl.u32 %v108, 7
    %v110 = vsub.s32 2, %v109
    %v111 = vrot.slane %v58, %v110
    %113 = vrot.lane.b32.xlu0 %v111, 8
    %v114 = vpop.permute.xlu0 %113
    %v116 = vmul.f32 %v60, %v114
    %v117 = vmul.f32 %v61, %v114
    %v118 = vmul.f32 %v62, %v114
    %v119 = vmul.f32 %v63, %v114
    %124 = vrot.lane.b32.xlu0 %v116, 120
    %v125 = vpop.permute.xlu0 %124
    %126 = vrot.lane.b32.xlu0 %v117, 120
    %v127 = vpop.permute.xlu0 %126
    %128 = vrot.lane.b32.xlu0 %v118, 120
    %v129 = vpop.permute.xlu0 %128
    %130 = vrot.lane.b32.xlu0 %v119, 120
    %v131 = vpop.permute.xlu0 %130
    %v136 = vadd.f32 %v104, %v125
    %v137 = vadd.f32 %v105, %v127
    %v138 = vadd.f32 %v106, %v129
    %v139 = vadd.f32 %v107, %v131
    %v140 = vld [vmem:[#allocation2 + $0x1] sm:$0xff]
    %v141 = vld [vmem:[#allocation2 + $0x9] sm:$0x3f]
    %v142 = vld [vmem:[#allocation2 + $0x11] sm:$0xff]
    %v143 = vld [vmem:[#allocation2 + $0x19] sm:$0x3f]
    %v144 = vlaneseq
    %v145 = vshrl.u32 %v144, 7
    %v146 = vsub.s32 3, %v145
    %v147 = vrot.slane %v58, %v146
    %v148 = vmul.f32 %v140, %v147
    %v149 = vmul.f32 %v141, %v147
    %v150 = vmul.f32 %v142, %v147
    %v151 = vmul.f32 %v143, %v147
    %v152 = vadd.f32 %v136, %v148
    %v153 = vadd.f32 %v137, %v149
    %v154 = vadd.f32 %v138, %v150
    %v155 = vadd.f32 %v139, %v151
    %v156 = vlaneseq
    %v157 = vshrl.u32 %v156, 7
    %v158 = vsub.s32 4, %v157
    %v159 = vrot.slane %v58, %v158
    %161 = vrot.lane.b32.xlu0 %v159, 4
    %v162 = vpop.permute.xlu0 %161
    %v164 = vmul.f32 %v140, %v162
    %v165 = vmul.f32 %v141, %v162
    %v166 = vmul.f32 %v142, %v162
    %v167 = vmul.f32 %v143, %v162
    %172 = vrot.lane.b32.xlu0 %v164, 124
    %v173 = vpop.permute.xlu0 %172
    %174 = vrot.lane.b32.xlu0 %v165, 124
    %v175 = vpop.permute.xlu0 %174
    %176 = vrot.lane.b32.xlu0 %v166, 124
    %v177 = vpop.permute.xlu0 %176
    %178 = vrot.lane.b32.xlu0 %v167, 124
    %v179 = vpop.permute.xlu0 %178
    %v184 = vadd.f32 %v152, %v173
    %v185 = vadd.f32 %v153, %v175
    %v186 = vadd.f32 %v154, %v177
    %v187 = vadd.f32 %v155, %v179
    %v188 = vlaneseq
    %v189 = vshrl.u32 %v188, 7
    %v190 = vsub.s32 5, %v189
    %v191 = vrot.slane %v58, %v190
    %193 = vrot.lane.b32.xlu0 %v191, 8
    %v194 = vpop.permute.xlu0 %193
    %v196 = vmul.f32 %v140, %v194
    %v197 = vmul.f32 %v141, %v194
    %v198 = vmul.f32 %v142, %v194
    %v199 = vmul.f32 %v143, %v194
    %204 = vrot.lane.b32.xlu0 %v196, 120
    %v205 = vpop.permute.xlu0 %204
    %206 = vrot.lane.b32.xlu0 %v197, 120
    %v207 = vpop.permute.xlu0 %206
    %208 = vrot.lane.b32.xlu0 %v198, 120
    %v209 = vpop.permute.xlu0 %208
    %210 = vrot.lane.b32.xlu0 %v199, 120
    %v211 = vpop.permute.xlu0 %210
    %v216 = vadd.f32 %v184, %v205
    %v217 = vadd.f32 %v185, %v207
    %v218 = vadd.f32 %v186, %v209
    %v219 = vadd.f32 %v187, %v211
    %v220 = vld [vmem:[#allocation2 + $0x2] sm:$0xff]
    %v221 = vld [vmem:[#allocation2 + $0xa] sm:$0x3f]
    %v222 = vld [vmem:[#allocation2 + $0x12] sm:$0xff]
    %v223 = vld [vmem:[#allocation2 + $0x1a] sm:$0x3f]
    %v224 = vlaneseq
    %v225 = vshrl.u32 %v224, 7
    %v226 = vsub.s32 6, %v225
    %v227 = vrot.slane %v58, %v226
    %v228 = vmul.f32 %v220, %v227
    %v229 = vmul.f32 %v221, %v227
    %v230 = vmul.f32 %v222, %v227
    %v231 = vmul.f32 %v223, %v227
    %v232 = vadd.f32 %v216, %v228
    %v233 = vadd.f32 %v217, %v229
    %v234 = vadd.f32 %v218, %v230
    %v235 = vadd.f32 %v219, %v231
    %v236 = vlaneseq
    %v237 = vshrl.u32 %v236, 7
    %v238 = vsub.s32 7, %v237
    %v239 = vrot.slane %v58, %v238
    %241 = vrot.lane.b32.xlu0 %v239, 4
    %v242 = vpop.permute.xlu0 %241
    %v244 = vmul.f32 %v220, %v242
    %v245 = vmul.f32 %v221, %v242
    %v246 = vmul.f32 %v222, %v242
    %v247 = vmul.f32 %v223, %v242
    %252 = vrot.lane.b32.xlu0 %v244, 124
    %v253 = vpop.permute.xlu0 %252
    %254 = vrot.lane.b32.xlu0 %v245, 124
    %v255 = vpop.permute.xlu0 %254
    %256 = vrot.lane.b32.xlu0 %v246, 124
    %v257 = vpop.permute.xlu0 %256
    %258 = vrot.lane.b32.xlu0 %v247, 124
    %v259 = vpop.permute.xlu0 %258
    %v264 = vadd.f32 %v232, %v253
    %v265 = vadd.f32 %v233, %v255
    %v266 = vadd.f32 %v234, %v257
    %v267 = vadd.f32 %v235, %v259
    %v268 = vlaneseq
    %v269 = vshrl.u32 %v268, 7
    %v270 = vsub.s32 0, %v269
    %v271 = vrot.slane %v59, %v270
    %273 = vrot.lane.b32.xlu0 %v271, 8
    %v274 = vpop.permute.xlu0 %273
    %v276 = vmul.f32 %v220, %v274
    %v277 = vmul.f32 %v221, %v274
    %v278 = vmul.f32 %v222, %v274
    %v279 = vmul.f32 %v223, %v274
    %284 = vrot.lane.b32.xlu0 %v276, 120
    %v285 = vpop.permute.xlu0 %284
    %286 = vrot.lane.b32.xlu0 %v277, 120
    %v287 = vpop.permute.xlu0 %286
    %288 = vrot.lane.b32.xlu0 %v278, 120
    %v289 = vpop.permute.xlu0 %288
    %290 = vrot.lane.b32.xlu0 %v279, 120
    %v291 = vpop.permute.xlu0 %290
    %v296 = vadd.f32 %v264, %v285
    %v297 = vadd.f32 %v265, %v287
    %v298 = vadd.f32 %v266, %v289
    %v299 = vadd.f32 %v267, %v291
    %v300 = vld [vmem:[#allocation6] sm:$0xff]
    %v301 = vld [vmem:[#allocation6 + $0x8] sm:$0xff]
    %v302 = vld [vmem:[#allocation6 + $0x10] sm:$0xff]
    %v303 = vld [vmem:[#allocation6 + $0x18] sm:$0xff]
    %v304 = vld [vmem:[#allocation6 + $0x20] sm:$0xff]
    %v305 = vld [vmem:[#allocation6 + $0x28] sm:$0xff]
    %v306 = vld [vmem:[#allocation6 + $0x30] sm:$0xff]
    %v307 = vld [vmem:[%s3] sm:$0x1]
    %v309 = vlaneseq
    %v310 = vshrl.u32 %v309, 7
    %v311 = vsub.s32 0, %v310
    %v312 = vrot.slane %v307, %v311
    %vm314 = vcmask 457728
    %v316 = vsel %vm314, %v296, 0
    %v319 = vsel %vm314, %v297, 0
    %321 = vmatprep.subr.mxu0 0.0
    %322 = vmatpush1.msra.mxu0 0.0
    %323 = vmatprep.subr.mxu0 0.0
    %324 = vmatpush1.msra.mxu0 0.0
    %325 = vmatprep.subr.mxu0 0.0
    %326 = vmatpush1.msra.mxu0 0.0
    %327 = vmatprep.subr.mxu0 0.0
    %328 = vmatpush1.msra.mxu0 0.0
    %329 = vmatprep.subr.mxu0 0.0
    %330 = vmatpush1.msra.mxu0 0.0
    %331 = vmatprep.subr.mxu0 0.0
    %332 = vmatpush1.msra.mxu0 0.0
    %333 = vmatprep.subr.mxu0 0.0
    %334 = vmatpush1.msra.mxu0 0.0
    %335 = vmatprep.subr.mxu0 0.0
    %336 = vmatpush1.msra.mxu0 0.0
    %337 = vmatprep.subr.mxu0 0.0
    %338 = vmatpush1.msra.mxu0 0.0
    %339 = vmatprep.subr.mxu0 0.0
    %340 = vmatpush1.msra.mxu0 %v306
    %341 = vmatprep.subr.mxu0 0.0
    %342 = vmatpush1.msra.mxu0 %v305
    %343 = vmatprep.subr.mxu0 0.0
    %344 = vmatpush1.msra.mxu0 %v304
    %345 = vmatprep.subr.mxu0 0.0
    %346 = vmatpush1.msra.mxu0 %v303
    %347 = vmatprep.subr.mxu0 0.0
    %348 = vmatpush1.msra.mxu0 %v302
    %349 = vmatprep.subr.mxu0 0.0
    %350 = vmatpush1.msra.mxu0 %v301
    %351 = vmatprep.subr.mxu0 0.0
    %352 = vmatpush1.msra.mxu0 %v300
    %353 = vmatprep.subr.mxu0 0.0
    %354 = vmatpush2.msra.mxu0 0.0
    %355 = vmatprep.subr.mxu0 0.0
    %356 = vmatpush2.msra.mxu0 0.0
    %357 = vmatprep.subr.mxu0 0.0
    %358 = vmatpush2.msra.mxu0 0.0
    %359 = vmatprep.subr.mxu0 0.0
    %360 = vmatpush2.msra.mxu0 0.0
    %361 = vmatprep.subr.mxu0 0.0
    %362 = vmatpush2.msra.mxu0 0.0
    %363 = vmatprep.subr.mxu0 0.0
    %364 = vmatpush2.msra.mxu0 0.0
    %365 = vmatprep.subr.mxu0 0.0
    %366 = vmatpush2.msra.mxu0 0.0
    %367 = vmatprep.subr.mxu0 0.0
    %368 = vmatpush2.msra.mxu0 0.0
    %369 = vmatprep.subr.mxu0 0.0
    %370 = vmatpush2.msra.mxu0 0.0
    %371 = vmatprep.subr.mxu0 0.0
    %372 = vmatpush2.msra.mxu0 0.0
    %373 = vmatprep.subr.mxu0 0.0
    %374 = vmatpush2.msra.mxu0 0.0
    %375 = vmatprep.subr.mxu0 0.0
    %376 = vmatpush2.msra.mxu0 0.0
    %377 = vmatprep.subr.mxu0 0.0
    %378 = vmatpush2.msra.mxu0 0.0
    %379 = vmatprep.subr.mxu0 0.0
    %380 = vmatpush2.msra.mxu0 0.0
    %381 = vmatprep.subr.mxu0 0.0
    %382 = vmatpush2.msra.mxu0 0.0
    %383 = vmatprep.subr.mxu0 0.0
    %384 = vmatpush2.msra.mxu0 0.0
    %385 = vmatprep.mubr.f32.mxu0 0.0
    %386 = vmatmul.mubr.f32.gmra.mxu0 %v316
    %v387 = vpop.f32.mrf.mxu0
    %v388 = vadd.f32 %v312, %v387
    %v389 = vpop.f32.mrf.mxu0
    %390 = vmatprep.mubr.f32.mxu0 0.0
    %391 = vmatmul.mubr.f32.gmra.mxu0 %v319
    %v392 = vpop.f32.mrf.mxu0
    %v393 = vadd.f32 %v312, %v392
    %v394 = vpop.f32.mrf.mxu0
    %395 = vdwg.mxu0
    %vm396 = vcmask 916480
    %397 = vst.msk [vmem:[%s4] sm:$0xff] %vm396, %v388
    %vm398 = vcmask 914432
    %399 = vst.msk [vmem:[%s4 + $0x8] sm:$0x3f] %vm398, %v393
    %v401 = vsel %vm314, %v298, 0
    %v404 = vsel %vm314, %v299, 0
    %406 = vmatprep.subr.mxu0 0.0
    %407 = vmatpush1.msra.mxu0 0.0
    %408 = vmatprep.subr.mxu0 0.0
    %409 = vmatpush1.msra.mxu0 0.0
    %410 = vmatprep.subr.mxu0 0.0
    %411 = vmatpush1.msra.mxu0 0.0
    %412 = vmatprep.subr.mxu0 0.0
    %413 = vmatpush1.msra.mxu0 0.0
    %414 = vmatprep.subr.mxu0 0.0
    %415 = vmatpush1.msra.mxu0 0.0
    %416 = vmatprep.subr.mxu0 0.0
    %417 = vmatpush1.msra.mxu0 0.0
    %418 = vmatprep.subr.mxu0 0.0
    %419 = vmatpush1.msra.mxu0 0.0
    %420 = vmatprep.subr.mxu0 0.0
    %421 = vmatpush1.msra.mxu0 0.0
    %422 = vmatprep.subr.mxu0 0.0
    %423 = vmatpush1.msra.mxu0 0.0
    %424 = vmatprep.subr.mxu0 0.0
    %425 = vmatpush1.msra.mxu0 %v306
    %426 = vmatprep.subr.mxu0 0.0
    %427 = vmatpush1.msra.mxu0 %v305
    %428 = vmatprep.subr.mxu0 0.0
    %429 = vmatpush1.msra.mxu0 %v304
    %430 = vmatprep.subr.mxu0 0.0
    %431 = vmatpush1.msra.mxu0 %v303
    %432 = vmatprep.subr.mxu0 0.0
    %433 = vmatpush1.msra.mxu0 %v302
    %434 = vmatprep.subr.mxu0 0.0
    %435 = vmatpush1.msra.mxu0 %v301
    %436 = vmatprep.subr.mxu0 0.0
    %437 = vmatpush1.msra.mxu0 %v300
    %438 = vmatprep.subr.mxu0 0.0
    %439 = vmatpush2.msra.mxu0 0.0
    %440 = vmatprep.subr.mxu0 0.0
    %441 = vmatpush2.msra.mxu0 0.0
    %442 = vmatprep.subr.mxu0 0.0
    %443 = vmatpush2.msra.mxu0 0.0
    %444 = vmatprep.subr.mxu0 0.0
    %445 = vmatpush2.msra.mxu0 0.0
    %446 = vmatprep.subr.mxu0 0.0
    %447 = vmatpush2.msra.mxu0 0.0
    %448 = vmatprep.subr.mxu0 0.0
    %449 = vmatpush2.msra.mxu0 0.0
    %450 = vmatprep.subr.mxu0 0.0
    %451 = vmatpush2.msra.mxu0 0.0
    %452 = vmatprep.subr.mxu0 0.0
    %453 = vmatpush2.msra.mxu0 0.0
    %454 = vmatprep.subr.mxu0 0.0
    %455 = vmatpush2.msra.mxu0 0.0
    %456 = vmatprep.subr.mxu0 0.0
    %457 = vmatpush2.msra.mxu0 0.0
    %458 = vmatprep.subr.mxu0 0.0
    %459 = vmatpush2.msra.mxu0 0.0
    %460 = vmatprep.subr.mxu0 0.0
    %461 = vmatpush2.msra.mxu0 0.0
    %462 = vmatprep.subr.mxu0 0.0
    %463 = vmatpush2.msra.mxu0 0.0
    %464 = vmatprep.subr.mxu0 0.0
    %465 = vmatpush2.msra.mxu0 0.0
    %466 = vmatprep.subr.mxu0 0.0
    %467 = vmatpush2.msra.mxu0 0.0
    %468 = vmatprep.subr.mxu0 0.0
    %469 = vmatpush2.msra.mxu0 0.0
    %470 = vmatprep.mubr.f32.mxu0 0.0
    %471 = vmatmul.mubr.f32.gmra.mxu0 %v401
    %v472 = vpop.f32.mrf.mxu0
    %v473 = vadd.f32 %v312, %v472
    %v474 = vpop.f32.mrf.mxu0
    %475 = vmatprep.mubr.f32.mxu0 0.0
    %476 = vmatmul.mubr.f32.gmra.mxu0 %v404
    %v477 = vpop.f32.mrf.mxu0
    %v478 = vadd.f32 %v312, %v477
    %v479 = vpop.f32.mrf.mxu0
    %480 = vdwg.mxu0
    %s481 = scalar_lea.vmem %s4, 16
    %482 = vst.msk [vmem:[%s481] sm:$0xff] %vm396, %v473
    %483 = vst.msk [vmem:[%s481 + $0x8] sm:$0x3f] %vm398, %v478
    // Predicated region
    $region30: #{tpu_custom_call.1} parent=1 // pred_check
      _
    $region31: #{tpu_custom_call.1} parent=1 // pred_check_branch
      %485 = sbr.rel (0) target = $region33
    $region32: #{tpu_custom_call.1} parent=1 // pred_region
      _
    $region33: #{tpu_custom_call.1} parent=1 // pred_fallthru
      _
    // Predicated region
    $region34: #{tpu_custom_call.1} parent=1 // pred_check
      _
    $region35: #{tpu_custom_call.1} parent=1 // pred_check_branch
      %487 = sbr.rel (0) target = $region37
    $region36: #{tpu_custom_call.1} parent=1 // pred_region
      _
    $region37: #{tpu_custom_call.1} parent=1 // pred_fallthru
      _
    %488 = vsyncpa [#allocation3], 1
    %489 = vsyncpa [#allocation5], 1

</llo_original>
